<compile_context>
chip_gen: v5e
topology: v5e:2x2
jax: 0.10.0
libtpu: 0.0.40
codegen_flags: <defaults>
</compile_context>

<pallas_src>
import functools

import numpy as np
import jax
import jax.numpy as jnp
from jax.experimental import pallas as pl
from jax.experimental.pallas import tpu as pltpu


def _round_up(x, m):
    return ((x + m - 1) // m) * m


# ---------------------------------------------------------------------------
# Kernel
# ---------------------------------------------------------------------------
def _optimizer_kernel(inp_ref, state_ref, wbig_ref, wih2_ref, wsm_ref,
                      stateo_ref, out_ref, *, H, preproc, preproc_factor):
    f32 = jnp.float32
    bf16 = jnp.bfloat16

    state = state_ref[...]                       # (T, 4H) = [h0 | h1 | c0 | c1]
    h01 = state[:, :2 * H]                       # (T, 2H) contiguous [h0 | h1]
    c0 = state[:, 2 * H:3 * H]
    c1 = state[:, 3 * H:4 * H]

    wsm = wsm_ref[...]                           # (8, 8H) f32 small weights/biases

    # Fused hidden-state matmul for BOTH cells (block-diagonal bf16 weights,
    # single MXU pass), biases (f32) folded in:
    #   hh[:, :4H] = h0 @ Whh1_T + b1 ,  hh[:, 4H:] = h1 @ Whh2_T + b2
    hh = (jnp.dot(h01.astype(bf16), wbig_ref[...], preferred_element_type=f32)
          + wsm[2:3, :])
    g1h = hh[:, :4 * H]
    g2h = hh[:, 4 * H:8 * H]

    # Input contribution of cell 1 via broadcast FMAs (no tiny MXU matmul),
    # with the optional preprocessing fused in-kernel.
    x = inp_ref[...].astype(f32)                 # (T, 1) raw gradient
    if preproc:
        thr = float(np.exp(-preproc_factor))
        escale = float(np.exp(preproc_factor))
        ax = jnp.abs(x)
        keep = ax >= thr
        col0 = jnp.where(keep, jnp.log(ax + 1e-8) * (1.0 / preproc_factor), -1.0)
        sgn = jnp.where(x > 0, 1.0, jnp.where(x < 0, -1.0, 0.0))
        col1 = jnp.where(keep, sgn, escale * x)
        gates1 = g1h + col0 * wsm[0:1, :4 * H] + col1 * wsm[1:2, :4 * H]
    else:
        gates1 = g1h + x * wsm[0:1, :4 * H]

    def lstm_act(gates, c):
        # packed gate order: (i, f, o, g) -> contiguous sigmoid / tanh slices
        sig = jax.nn.sigmoid(gates[:, :3 * H])
        g = jnp.tanh(gates[:, 3 * H:4 * H])
        i = sig[:, :H]
        f = sig[:, H:2 * H]
        o = sig[:, 2 * H:3 * H]
        c_new = f * c + i * g
        h_new = o * jnp.tanh(c_new)
        return h_new, c_new

    h0n, c0n = lstm_act(gates1, c0)

    # cell 2: only the h0_new-dependent matmul remains (bf16 single pass).
    gates2 = g2h + jnp.dot(h0n.astype(bf16), wih2_ref[...],
                           preferred_element_type=f32)
    h1n, c1n = lstm_act(gates2, c1)

    # output Linear(H, 1) as a VPU/XLU reduction instead of a 1-column matmul.
    wo = wsm[3:4, :]                             # row 3: [:H]=w_out, [H]=b_out
    out = jnp.sum(h1n * wo[:, :H], axis=-1, keepdims=True) + wo[:, H:H + 1]

    # Lane-dense packed state output (same (T, 4H) layout as the input -> one
    # unmasked full-block store, contiguous HBM rows, aliasable).
    stateo_ref[...] = jnp.concatenate([h0n, h1n, c0n, c1n], axis=1)
    # TODO(synk): the (T, 1) scalar output could be folded into the state block
    # to drop one tiny DMA stream; kept separate to keep the aliasing simple.
    out_ref[...] = out


# ---------------------------------------------------------------------------
# Parameter construction / packing
# ---------------------------------------------------------------------------
def make_params(key, hidden_sz=20, preproc=False):
    """Logical parameters in PyTorch LSTMCell / Linear layout (gate order i,f,g,o)."""
    H = hidden_sz
    in_sz = 2 if preproc else 1
    ks = jax.random.split(key, 10)
    s = 0.1
    n = jax.random.normal
    return {
        "w_ih1": n(ks[0], (4 * H, in_sz), jnp.float32) * s,
        "w_hh1": n(ks[1], (4 * H, H), jnp.float32) * s,
        "b_ih1": n(ks[2], (4 * H,), jnp.float32) * s,
        "b_hh1": n(ks[3], (4 * H,), jnp.float32) * s,
        "w_ih2": n(ks[4], (4 * H, H), jnp.float32) * s,
        "w_hh2": n(ks[5], (4 * H, H), jnp.float32) * s,
        "b_ih2": n(ks[6], (4 * H,), jnp.float32) * s,
        "b_hh2": n(ks[7], (4 * H,), jnp.float32) * s,
        "w_out": n(ks[8], (1, H), jnp.float32) * s,
        "b_out": n(ks[9], (1,), jnp.float32) * s,
    }


def pack_params(p, hidden_sz, preproc):
    """Pack & pre-transpose parameters for the kernel.

    Gate columns are re-ordered from PyTorch (i,f,g,o) to (i,f,o,g).
    MXU operands (w_big, w_ih2) are stored in bf16; small VPU weights/biases in f32.
    """
    H = hidden_sz
    in_sz = 2 if preproc else 1

    # permutation: packed position -> original PyTorch gate row
    perm = np.concatenate([np.arange(0, H), np.arange(H, 2 * H),
                           np.arange(3 * H, 4 * H), np.arange(2 * H, 3 * H)])

    def reorder(w):
        return np.asarray(w, np.float32)[perm]

    wih1_t = reorder(p["w_ih1"]).T                    # (in_sz, 4H)
    whh1_t = reorder(p["w_hh1"]).T                    # (H, 4H)
    wih2_t = reorder(p["w_ih2"]).T                    # (H, 4H)
    whh2_t = reorder(p["w_hh2"]).T                    # (H, 4H)
    b1 = reorder(np.asarray(p["b_ih1"]) + np.asarray(p["b_hh1"]))   # (4H,)
    b2 = reorder(np.asarray(p["b_ih2"]) + np.asarray(p["b_hh2"]))   # (4H,)

    # Block-diagonal fused hidden-state weight (pure matmul operand, full-ref).
    w_big = np.zeros((2 * H, 8 * H), np.float32)
    w_big[0:H, 0:4 * H] = whh1_t
    w_big[H:2 * H, 4 * H:8 * H] = whh2_t

    # Small VPU-side weights / biases, f32, one 8-row sublane tile.
    w_small = np.zeros((8, 8 * H), np.float32)
    w_small[0:in_sz, 0:4 * H] = wih1_t                # rows 0..1: Wih1_T
    w_small[2, 0:4 * H] = b1                          # row 2: [b1 | b2]
    w_small[2, 4 * H:8 * H] = b2
    w_small[3, 0:H] = np.asarray(p["w_out"], np.float32)[0]
    w_small[3, H] = float(np.asarray(p["b_out"], np.float32)[0])

    return {
        "w_big": jnp.asarray(w_big, jnp.bfloat16),
        "w_ih2": jnp.asarray(wih2_t, jnp.bfloat16),
        "w_small": jnp.asarray(w_small, jnp.float32),
    }


# ---------------------------------------------------------------------------
# Forward wrappers
# ---------------------------------------------------------------------------
_MAX_TILE_N = 4096   # live set ~2.5 KB/row -> ~10 MiB; safe on v5e/v6e/v7x with
                     # the explicit vmem_limit_bytes below.


def _pick_tile_n(N):
    if N <= 16:
        return N
    # >= 2 grid steps so the "parallel" axis can shard across v7x's 2 TCs;
    # tile must be a multiple of 8 (sublane) when it does not cover all rows.
    return min(_MAX_TILE_N, _round_up(pl.cdiv(N, 2), 8))


@functools.partial(jax.jit, static_argnames=("preproc", "preproc_factor"))
def optimizer_forward_packed(inp, state, w_big, w_ih2, w_small, *,
                             preproc=False, preproc_factor=10.0):
    """Recurrent-friendly API: state is a packed (N, 4H) f32 buffer
    [h0 | h1 | c0 | c1], updated in place in HBM (input_output_aliases)."""
    f32 = jnp.float32
    inp = inp.astype(f32)
    state = state.astype(f32)
    N, fourH = state.shape
    H = fourH // 4

    TILE_N = _pick_tile_n(N)
    grid = (pl.cdiv(N, TILE_N),)

    kernel = functools.partial(_optimizer_kernel, H=H, preproc=preproc,
                               preproc_factor=preproc_factor)

    in_specs = [
        pl.BlockSpec((TILE_N, 1), lambda i: (i, 0)),          # inp
        pl.BlockSpec((TILE_N, fourH), lambda i: (i, 0)),      # packed state
        pl.BlockSpec(w_big.shape, lambda i: (0, 0)),          # fused Whh (bf16)
        pl.BlockSpec(w_ih2.shape, lambda i: (0, 0)),          # Wih2_T (bf16)
        pl.BlockSpec(w_small.shape, lambda i: (0, 0)),        # small f32 weights
    ]
    out_specs = (
        pl.BlockSpec((TILE_N, fourH), lambda i: (i, 0)),      # packed new state
        pl.BlockSpec((TILE_N, 1), lambda i: (i, 0)),          # output(h1)
    )
    out_shape = (
        jax.ShapeDtypeStruct((N, fourH), f32),
        jax.ShapeDtypeStruct((N, 1), f32),
    )

    new_state, out = pl.pallas_call(
        kernel,
        grid=grid,
        in_specs=in_specs,
        out_specs=out_specs,
        out_shape=out_shape,
        input_output_aliases={1: 0},   # packed state updated in place in HBM
        compiler_params=pltpu.CompilerParams(
            dimension_semantics=("parallel",),
            vmem_limit_bytes=48 * 1024 * 1024),
    )(inp, state, w_big, w_ih2, w_small)
    return out, new_state


def pack_state(hidden, cell):
    return jnp.concatenate([hidden[0], hidden[1], cell[0], cell[1]],
                           axis=1).astype(jnp.float32)


def unpack_state(state, H):
    return ((state[:, :H], state[:, H:2 * H]),
            (state[:, 2 * H:3 * H], state[:, 3 * H:4 * H]))


def optimizer_forward(inp, hidden, cell, packed, *, preproc=False,
                      preproc_factor=10.0):
    """Module-compatible API: hidden, cell are tuples of two (N, H) arrays."""
    H = hidden[0].shape[1]
    state = pack_state(hidden, cell)
    out, new_state = optimizer_forward_packed(
        inp, state, packed["w_big"], packed["w_ih2"], packed["w_small"],
        preproc=preproc, preproc_factor=preproc_factor)
    (h0, h1), (c0, c1) = unpack_state(new_state, H)
    return out, (h0, h1), (c0, c1)


# ---------------------------------------------------------------------------
# Pure-JAX reference (PyTorch semantics, f32, unpacked logical params)
# ---------------------------------------------------------------------------
def _preproc_reference(inp, preproc_factor):
    thr = float(np.exp(-preproc_factor))
    x = inp[:, 0]
    keep = jnp.abs(x) >= thr
    col0 = jnp.where(keep, jnp.log(jnp.abs(x) + 1e-8) / preproc_factor, -1.0)
    col1 = jnp.where(keep, jnp.sign(x), float(np.exp(preproc_factor)) * x)
    return jnp.stack([col0, col1], axis=1)


def reference_forward(inp, hidden, cell, p, *, preproc=False, preproc_factor=10.0):
    H = hidden[0].shape[1]
    x = _preproc_reference(inp, preproc_factor) if preproc else inp

    def cell_fn(x, h, c, w_ih, w_hh, b_ih, b_hh):
        gates = x @ w_ih.T + h @ w_hh.T + b_ih + b_hh
        i = jax.nn.sigmoid(gates[:, 0 * H:1 * H])
        f = jax.nn.sigmoid(gates[:, 1 * H:2 * H])
        g = jnp.tanh(gates[:, 2 * H:3 * H])
        o = jax.nn.sigmoid(gates[:, 3 * H:4 * H])
        c_new = f * c + i * g
        return o * jnp.tanh(c_new), c_new

    h0, c0 = cell_fn(x, hidden[0], cell[0],
                     p["w_ih1"], p["w_hh1"], p["b_ih1"], p["b_hh1"])
    h1, c1 = cell_fn(h0, hidden[1], cell[1],
                     p["w_ih2"], p["w_hh2"], p["b_ih2"], p["b_hh2"])
    out = h1 @ p["w_out"].T + p["b_out"]
    return out, (h0, h1), (c0, c1)


# ---------------------------------------------------------------------------
# Demo / correctness check
# ---------------------------------------------------------------------------
if __name__ == "__main__":
    key = jax.random.PRNGKey(0)
    kp, kx, kx2, kh0, kh1, kc0, kc1 = jax.random.split(key, 7)

    H = 20          # hidden_sz (module default)
    # bf16 MXU operands -> compare vs. the f32 reference with a loosened tolerance.
    ATOL = 1e-2
    RTOL = 1e-2

    # N=8: single tile; N=200: 2 grid steps + padded tail tile.
    for N in (8, 200):
        inp = jax.random.normal(kx, (N, 1), jnp.float32) * 0.5
        # exercise both preproc branches (|x| >= / < exp(-preproc_factor))
        inp = inp.at[0, 0].set(1e-6).at[1, 0].set(-2e-6)
        inp2 = jax.random.normal(kx2, (N, 1), jnp.float32) * 0.5

        hidden = (jax.random.normal(kh0, (N, H), jnp.float32) * 0.1,
                  jax.random.normal(kh1, (N, H), jnp.float32) * 0.1)
        cell = (jax.random.normal(kc0, (N, H), jnp.float32) * 0.1,
                jax.random.normal(kc1, (N, H), jnp.float32) * 0.1)

        for preproc in (False, True):
            params = make_params(kp, hidden_sz=H, preproc=preproc)
            packed = pack_params(params, H, preproc)

            # step 1 via the module-compatible tuple API
            out_t, hid_t, cel_t = optimizer_forward(
                inp, hidden, cell, packed, preproc=preproc)

            # recurrent usage: 2 chained steps, state stays packed & aliased
            state = pack_state(hidden, cell)
            out1, state = optimizer_forward_packed(
                inp, state, packed["w_big"], packed["w_ih2"], packed["w_small"],
                preproc=preproc)
            out2, state = optimizer_forward_packed(
                inp2, state, packed["w_big"], packed["w_ih2"], packed["w_small"],
                preproc=preproc)
            jax.block_until_ready((out_t, out1, out2, state))
            (h0, h1), (c0, c1) = unpack_state(state, H)

            # reference: two f32 steps
            r_out1, r_hid, r_cel = reference_forward(
                inp, hidden, cell, params, preproc=preproc)
            r_out2, r_hid, r_cel = reference_forward(
                inp2, r_hid, r_cel, params, preproc=preproc)

            checks = [
                ("out_t", out_t, r_out1), ("out1", out1, r_out1),
                ("h0_t", hid_t[0], None), ("out2", out2, r_out2),
                ("h0", h0, r_hid[0]), ("h1", h1, r_hid[1]),
                ("c0", c0, r_cel[0]), ("c1", c1, r_cel[1]),
            ]
            for name, a, b in checks:
                if b is None:
                    continue
                assert np.allclose(np.asarray(a), np.asarray(b),
                                   atol=ATOL, rtol=RTOL), \
                    f"mismatch vs reference: {name} (N={N}, preproc={preproc})"

    print("KERNEL_OK")
</pallas_src>

<mosaic_0001>
module attributes {stable_mosaic.version = 11 : i64} {
  func.func @_optimizer_kernel(%arg0: i32, %arg1: memref<8x1xf32, #tpu.memory_space<vmem>>, %arg2: memref<8x80xf32, #tpu.memory_space<vmem>>, %arg3: memref<40x160xbf16, #tpu.memory_space<vmem>>, %arg4: memref<20x80xbf16, #tpu.memory_space<vmem>>, %arg5: memref<8x160xf32, #tpu.memory_space<vmem>>, %arg6: memref<8x80xf32, #tpu.memory_space<vmem>>, %arg7: memref<8x1xf32, #tpu.memory_space<vmem>>) attributes {dimension_semantics = [#tpu.dimension_semantics<parallel>], iteration_bounds = array<i64: 1>, scalar_prefetch = 0 : i64, scratch_operands = 0 : i64, tpu.core_type = #tpu.core_type<tc>, window_params = [{transform_indices = @transform_0, window_bounds = array<i64: 8, 1>}, {transform_indices = @transform_1, window_bounds = array<i64: 8, 80>}, {pipeline_mode = #tpu.pipeline_mode<synchronous>, transform_indices = @transform_2, window_bounds = array<i64: 40, 160>}, {pipeline_mode = #tpu.pipeline_mode<synchronous>, transform_indices = @transform_3, window_bounds = array<i64: 20, 80>}, {pipeline_mode = #tpu.pipeline_mode<synchronous>, transform_indices = @transform_4, window_bounds = array<i64: 8, 160>}, {transform_indices = @transform_5, window_bounds = array<i64: 8, 80>}, {transform_indices = @transform_6, window_bounds = array<i64: 8, 1>}]} {
    %c0 = arith.constant 0 : index
    %c0_0 = arith.constant 0 : index
    %0 = vector.load %arg2[%c0, %c0_0] : memref<8x80xf32, #tpu.memory_space<vmem>>, vector<8x80xf32>
    %1 = vector.extract_strided_slice %0 {offsets = [0, 0], sizes = [8, 40], strides = [1, 1]} : vector<8x80xf32> to vector<8x40xf32>
    %2 = vector.extract_strided_slice %0 {offsets = [0, 40], sizes = [8, 20], strides = [1, 1]} : vector<8x80xf32> to vector<8x20xf32>
    %3 = vector.extract_strided_slice %0 {offsets = [0, 60], sizes = [8, 20], strides = [1, 1]} : vector<8x80xf32> to vector<8x20xf32>
    %c0_1 = arith.constant 0 : index
    %c0_2 = arith.constant 0 : index
    %4 = vector.load %arg5[%c0_1, %c0_2] : memref<8x160xf32, #tpu.memory_space<vmem>>, vector<8x160xf32>
    %5 = arith.truncf %1 : vector<8x40xf32> to vector<8x40xbf16>
    %c0_3 = arith.constant 0 : index
    %c0_4 = arith.constant 0 : index
    %6 = vector.load %arg3[%c0_3, %c0_4] : memref<40x160xbf16, #tpu.memory_space<vmem>>, vector<40x160xbf16>
    %cst = arith.constant dense<0.000000e+00> : vector<8x160xf32>
    %7 = tpu.matmul %5, %6, %cst {dimension_numbers = #tpu.dot_dimension_numbers<[1], [0], [0], [1], [0, 0, 1, 1], [], []>} : vector<8x40xbf16>, vector<40x160xbf16>, vector<8x160xf32> -> vector<8x160xf32>
    %8 = vector.extract_strided_slice %4 {offsets = [2, 0], sizes = [1, 160], strides = [1, 1]} : vector<8x160xf32> to vector<1x160xf32>
    %9 = vector.broadcast %8 : vector<1x160xf32> to vector<8x160xf32>
    %10 = arith.addf %7, %9 : vector<8x160xf32>
    %11 = vector.extract_strided_slice %10 {offsets = [0, 0], sizes = [8, 80], strides = [1, 1]} : vector<8x160xf32> to vector<8x80xf32>
    %12 = vector.extract_strided_slice %10 {offsets = [0, 80], sizes = [8, 80], strides = [1, 1]} : vector<8x160xf32> to vector<8x80xf32>
    %c0_5 = arith.constant 0 : index
    %c0_6 = arith.constant 0 : index
    %13 = vector.load %arg1[%c0_5, %c0_6] : memref<8x1xf32, #tpu.memory_space<vmem>>, vector<8x1xf32>
    %14 = vector.extract_strided_slice %4 {offsets = [0, 0], sizes = [1, 80], strides = [1, 1]} : vector<8x160xf32> to vector<1x80xf32>
    %15 = vector.broadcast %13 : vector<8x1xf32> to vector<8x80xf32>
    %16 = vector.broadcast %14 : vector<1x80xf32> to vector<8x80xf32>
    %17 = arith.mulf %15, %16 : vector<8x80xf32>
    %18 = arith.addf %11, %17 : vector<8x80xf32>
    %19 = vector.extract_strided_slice %18 {offsets = [0, 0], sizes = [8, 60], strides = [1, 1]} : vector<8x80xf32> to vector<8x60xf32>
    %20 = arith.negf %19 : vector<8x60xf32>
    %21 = math.exp %20 : vector<8x60xf32>
    %cst_7 = arith.constant 1.000000e+00 : f32
    %22 = vector.broadcast %cst_7 : f32 to vector<8x60xf32>
    %23 = arith.addf %22, %21 : vector<8x60xf32>
    %24 = arith.divf %22, %23 : vector<8x60xf32>
    %25 = vector.extract_strided_slice %18 {offsets = [0, 60], sizes = [8, 20], strides = [1, 1]} : vector<8x80xf32> to vector<8x20xf32>
    %26 = math.tanh %25 : vector<8x20xf32>
    %27 = vector.extract_strided_slice %24 {offsets = [0, 0], sizes = [8, 20], strides = [1, 1]} : vector<8x60xf32> to vector<8x20xf32>
    %28 = vector.extract_strided_slice %24 {offsets = [0, 20], sizes = [8, 20], strides = [1, 1]} : vector<8x60xf32> to vector<8x20xf32>
    %29 = vector.extract_strided_slice %24 {offsets = [0, 40], sizes = [8, 20], strides = [1, 1]} : vector<8x60xf32> to vector<8x20xf32>
    %30 = arith.mulf %28, %2 : vector<8x20xf32>
    %31 = arith.mulf %27, %26 : vector<8x20xf32>
    %32 = arith.addf %30, %31 : vector<8x20xf32>
    %33 = math.tanh %32 : vector<8x20xf32>
    %34 = arith.mulf %29, %33 : vector<8x20xf32>
    %35 = arith.truncf %34 : vector<8x20xf32> to vector<8x20xbf16>
    %c0_8 = arith.constant 0 : index
    %c0_9 = arith.constant 0 : index
    %36 = vector.load %arg4[%c0_8, %c0_9] : memref<20x80xbf16, #tpu.memory_space<vmem>>, vector<20x80xbf16>
    %cst_10 = arith.constant dense<0.000000e+00> : vector<8x80xf32>
    %37 = tpu.matmul %35, %36, %cst_10 {dimension_numbers = #tpu.dot_dimension_numbers<[1], [0], [0], [1], [0, 0, 1, 1], [], []>} : vector<8x20xbf16>, vector<20x80xbf16>, vector<8x80xf32> -> vector<8x80xf32>
    %38 = arith.addf %12, %37 : vector<8x80xf32>
    %39 = vector.extract_strided_slice %38 {offsets = [0, 0], sizes = [8, 60], strides = [1, 1]} : vector<8x80xf32> to vector<8x60xf32>
    %40 = arith.negf %39 : vector<8x60xf32>
    %41 = math.exp %40 : vector<8x60xf32>
    %cst_11 = arith.constant 1.000000e+00 : f32
    %42 = vector.broadcast %cst_11 : f32 to vector<8x60xf32>
    %43 = arith.addf %42, %41 : vector<8x60xf32>
    %44 = arith.divf %42, %43 : vector<8x60xf32>
    %45 = vector.extract_strided_slice %38 {offsets = [0, 60], sizes = [8, 20], strides = [1, 1]} : vector<8x80xf32> to vector<8x20xf32>
    %46 = math.tanh %45 : vector<8x20xf32>
    %47 = vector.extract_strided_slice %44 {offsets = [0, 0], sizes = [8, 20], strides = [1, 1]} : vector<8x60xf32> to vector<8x20xf32>
    %48 = vector.extract_strided_slice %44 {offsets = [0, 20], sizes = [8, 20], strides = [1, 1]} : vector<8x60xf32> to vector<8x20xf32>
    %49 = vector.extract_strided_slice %44 {offsets = [0, 40], sizes = [8, 20], strides = [1, 1]} : vector<8x60xf32> to vector<8x20xf32>
    %50 = arith.mulf %48, %3 : vector<8x20xf32>
    %51 = arith.mulf %47, %46 : vector<8x20xf32>
    %52 = arith.addf %50, %51 : vector<8x20xf32>
    %53 = math.tanh %52 : vector<8x20xf32>
    %54 = arith.mulf %49, %53 : vector<8x20xf32>
    %55 = vector.extract_strided_slice %4 {offsets = [3, 0], sizes = [1, 160], strides = [1, 1]} : vector<8x160xf32> to vector<1x160xf32>
    %56 = vector.extract_strided_slice %55 {offsets = [0, 0], sizes = [1, 20], strides = [1, 1]} : vector<1x160xf32> to vector<1x20xf32>
    %57 = vector.broadcast %56 : vector<1x20xf32> to vector<8x20xf32>
    %58 = arith.mulf %54, %57 : vector<8x20xf32>
    %cst_12 = arith.constant dense<0.000000e+00> : vector<8xf32>
    %59 = vector.multi_reduction <add>, %58, %cst_12 [1] : vector<8x20xf32> to vector<8xf32>
    %60 = vector.shape_cast %59 : vector<8xf32> to vector<8x1xf32>
    %61 = vector.extract_strided_slice %55 {offsets = [0, 20], sizes = [1, 1], strides = [1, 1]} : vector<1x160xf32> to vector<1x1xf32>
    %62 = vector.broadcast %61 : vector<1x1xf32> to vector<8x1xf32>
    %63 = arith.addf %60, %62 : vector<8x1xf32>
    %64 = tpu.concatenate %34, %54, %32, %52 in 1 : vector<8x20xf32>, vector<8x20xf32>, vector<8x20xf32>, vector<8x20xf32> -> vector<8x80xf32>
    %c0_13 = arith.constant 0 : index
    %c0_14 = arith.constant 0 : index
    %65 = vector.load %arg6[%c0_13, %c0_14] : memref<8x80xf32, #tpu.memory_space<vmem>>, vector<8x80xf32>
    tpu.vector_store %arg6[%c0_13, %c0_14], %64 {strides = array<i32>} : memref<8x80xf32, #tpu.memory_space<vmem>>, vector<8x80xf32>,
    %c0_15 = arith.constant 0 : index
    %c0_16 = arith.constant 0 : index
    %66 = vector.load %arg7[%c0_15, %c0_16] : memref<8x1xf32, #tpu.memory_space<vmem>>, vector<8x1xf32>
    tpu.vector_store %arg7[%c0_15, %c0_16], %63 {strides = array<i32>} : memref<8x1xf32, #tpu.memory_space<vmem>>, vector<8x1xf32>,
    return
  }
  func.func @transform_0(%arg0: i32) -> (i32, i32) {
    %c0_i32 = arith.constant 0 : i32
    %c0_i32_0 = arith.constant 0 : i32
    return %arg0, %c0_i32 : i32, i32
  }
  func.func @transform_1(%arg0: i32) -> (i32, i32) {
    %c0_i32 = arith.constant 0 : i32
    %c0_i32_0 = arith.constant 0 : i32
    return %arg0, %c0_i32 : i32, i32
  }
  func.func @transform_2(%arg0: i32) -> (i32, i32) {
    %c0_i32 = arith.constant 0 : i32
    %c0_i32_0 = arith.constant 0 : i32
    %c0_i32_1 = arith.constant 0 : i32
    return %c0_i32, %c0_i32_0 : i32, i32
  }
  func.func @transform_3(%arg0: i32) -> (i32, i32) {
    %c0_i32 = arith.constant 0 : i32
    %c0_i32_0 = arith.constant 0 : i32
    %c0_i32_1 = arith.constant 0 : i32
    return %c0_i32, %c0_i32_0 : i32, i32
  }
  func.func @transform_4(%arg0: i32) -> (i32, i32) {
    %c0_i32 = arith.constant 0 : i32
    %c0_i32_0 = arith.constant 0 : i32
    %c0_i32_1 = arith.constant 0 : i32
    return %c0_i32, %c0_i32_0 : i32, i32
  }
  func.func @transform_5(%arg0: i32) -> (i32, i32) {
    %c0_i32 = arith.constant 0 : i32
    %c0_i32_0 = arith.constant 0 : i32
    return %arg0, %c0_i32 : i32, i32
  }
  func.func @transform_6(%arg0: i32) -> (i32, i32) {
    %c0_i32 = arith.constant 0 : i32
    %c0_i32_0 = arith.constant 0 : i32
    return %arg0, %c0_i32 : i32, i32
  }
}

</mosaic_0001>

<llo_original>
// kernel: optimizer_forward_packed.1
$region0: #{optimizer_forward_packed.1}
  #allocation0 [shape = 'u32[]', space=smem, size = 0x4, offset = 0x4, fixed_abs, tag = 'smem constant byte address 0x4 - core index']
  #allocation1 [shape = 'u32[72,128]{1,0:T(1,128)}', space=vmem, size = 0x9000, scoped, tag = 'internal scratch']
  %s0 = inlined_call_operand.vmem [shape: f32[8,1], index: 0, kind: input, shape index: {}]
  %s1 = inlined_call_operand.vmem [shape: f32[8,80], index: 1, kind: input, shape index: {}, may-alias: {1,5}]
  %s2 = inlined_call_operand.hbm [shape: bf16[40,160], index: 2, kind: input, shape index: {}]
  %s3 = inlined_call_operand.hbm [shape: bf16[20,80], index: 3, kind: input, shape index: {}]
  %s4 = inlined_call_operand.vmem [shape: f32[8,160], index: 4, kind: input, shape index: {}]
  %s5 = inlined_call_operand.vmem [shape: f32[8,80], index: 5, kind: output, shape index: {0}, may-alias: {1,5}]
  %s6 = inlined_call_operand.vmem [shape: f32[8,1], index: 6, kind: output, shape index: {1}]
  %7 = xla_tuple %s5, %s6
  %s8 = sld [smem:[#allocation0]]
  $region46: #{optimizer_forward_packed.1} parent=0
    _
  %s10 = ssub.s32 1, %s8
  %s11 = scalar_select 0, %s10, %s8
  $region1: #{optimizer_forward_packed.1} parent=0
    #allocation2 [shape = 'u8[20480]{0}', space=vmem, size = 0x5000, scoped, tag = 'input window, operand 2, single buffered']
    #allocation3 [shape = 's32[1]{0}', space=sflag, size = 0x4, scoped, tag = 'scoped memory for optimizer_forward_packed.1']
    #allocation4 [shape = 'u8[6144]{0}', space=vmem, size = 0x1800, scoped, tag = 'input window, operand 3, single buffered']
    #allocation5 [shape = 's32[1]{0}', space=sflag, size = 0x4, scoped, tag = 'scoped memory for optimizer_forward_packed.1']
    %12 = vsyncpa [#allocation3], 0
    %13 = vsyncpa [#allocation5], 0
    // Predicated region
    $region2: #{optimizer_forward_packed.1} parent=1 // pred_check
      _
    $region3: #{optimizer_forward_packed.1} parent=1 // pred_check_branch
      %15 = sbr.rel (0) target = $region5
    $region4: #{optimizer_forward_packed.1} parent=1 // pred_region
      _
    $region5: #{optimizer_forward_packed.1} parent=1 // pred_fallthru
      _
    // Predicated region
    $region6: #{optimizer_forward_packed.1} parent=1 // pred_check
      _
    $region7: #{optimizer_forward_packed.1} parent=1 // pred_check_branch
      %17 = sbr.rel (0) target = $region9
    $region8: #{optimizer_forward_packed.1} parent=1 // pred_region
      _
    $region9: #{optimizer_forward_packed.1} parent=1 // pred_fallthru
      _
    // Predicated region
    $region10: #{optimizer_forward_packed.1} parent=1 // pred_check
      _
    $region11: #{optimizer_forward_packed.1} parent=1 // pred_check_branch
      %19 = sbr.rel (0) target = $region13
    $region12: #{optimizer_forward_packed.1} parent=1 // pred_region
      %21 = vsyncadd [#allocation3], 0
      %s22 = sshll.u32 %s2, 4
      %s23 = int_to_ptr.hbm [resolvable:$true] %s22
      %s24 = sshll.u32 [#allocation2], 4
      %s25 = int_to_ptr.vmem [resolvable:$true] %s24
      %30 = dma.hbm_to_vmem [thread:$0]  %s23, 640, %s25, [#allocation3], 128, 128, 8
    $region13: #{optimizer_forward_packed.1} parent=1 // pred_fallthru
      _
    // Predicated region
    $region14: #{optimizer_forward_packed.1} parent=1 // pred_check
      _
    $region15: #{optimizer_forward_packed.1} parent=1 // pred_check_branch
      %32 = sbr.rel (0) target = $region17
    $region16: #{optimizer_forward_packed.1} parent=1 // pred_region
      %34 = vsyncadd [#allocation5], 0
      %s35 = sshll.u32 %s3, 4
      %s36 = int_to_ptr.hbm [resolvable:$true] %s35
      %s37 = sshll.u32 [#allocation4], 4
      %s38 = int_to_ptr.vmem [resolvable:$true] %s37
      %43 = dma.hbm_to_vmem [thread:$0]  %s36, 192, %s38, [#allocation5], 64, 64, 4
    $region17: #{optimizer_forward_packed.1} parent=1 // pred_fallthru
      _
    // Predicated region
    $region18: #{optimizer_forward_packed.1} parent=1 // pred_check
      _
    $region19: #{optimizer_forward_packed.1} parent=1 // pred_check_branch
      %45 = sbr.rel (0) target = $region21
    $region20: #{optimizer_forward_packed.1} parent=1 // pred_region
      _
    $region21: #{optimizer_forward_packed.1} parent=1 // pred_fallthru
      _
    // Predicated region
    $region22: #{optimizer_forward_packed.1} parent=1 // pred_check
      _
    $region23: #{optimizer_forward_packed.1} parent=1 // pred_check_branch
      %47 = sbr.rel (0) target = $region25
    $region24: #{optimizer_forward_packed.1} parent=1 // pred_region
      %49 = dma.done [#allocation3], 640
    $region25: #{optimizer_forward_packed.1} parent=1 // pred_fallthru
      _
    // Predicated region
    $region26: #{optimizer_forward_packed.1} parent=1 // pred_check
      _
    $region27: #{optimizer_forward_packed.1} parent=1 // pred_check_branch
      %51 = sbr.rel (0) target = $region29
    $region28: #{optimizer_forward_packed.1} parent=1 // pred_region
      %53 = dma.done [#allocation5], 192
    $region29: #{optimizer_forward_packed.1} parent=1 // pred_fallthru
      _
    %v55 = vld [vmem:[%s1] sm:$0xff]
    %v56 = vld [vmem:[%s4] sm:$0xff]
    %v57 = vld [vmem:[%s4 + $0x8] sm:$0xff]
    %v58 = vpack.c.bf16 %v55, %v55
    %v59 = vld [vmem:[#allocation2] sm:$0xff]
    %v60 = vld [vmem:[#allocation2 + $0x8] sm:$0xff]
    %v61 = vld [vmem:[#allocation2 + $0x10] sm:$0xff]
    %v62 = vld [vmem:[#allocation2 + $0x18] sm:$0xff]
    %v63 = vld [vmem:[#allocation2 + $0x20] sm:$0xff]
    %v64 = vperm.slane %v56, 2
    %v65 = vperm.slane %v57, 2
    %v71 = vunpack.c.l.b16 %v59
    %v72 = vunpack.c.h.b16 %v59
    %v73 = vunpack.c.l.b16 %v60
    %v74 = vunpack.c.h.b16 %v60
    %v75 = vunpack.c.l.b16 %v61
    %v76 = vunpack.c.h.b16 %v61
    %v77 = vunpack.c.l.b16 %v62
    %v78 = vunpack.c.h.b16 %v62
    %v79 = vunpack.c.l.b16 %v63
    %v80 = vunpack.c.h.b16 %v63
    %v81 = vpack.c.b16 %v73, %v71
    %v82 = vpack.c.b16 %v74, %v72
    %v83 = vpack.c.b16 %v77, %v75
    %v84 = vpack.c.b16 %v78, %v76
    %v85 = vpack.c.b16 %v79, %v79
    %v86 = vpack.c.b16 %v80, %v80
    %vm91 = vcmask 326656
    %v93 = vsel %vm91, %v58, 0
    %vm95 = vcmask 1043456
    %v97 = vsel %vm95, %v85, 0
    %v100 = vsel %vm95, %v86, 0
    %102 = vmatpush.bf16.msra.mxu0 0
    %103 = vmatpush.bf16.msra.mxu0 0
    %104 = vmatpush.bf16.msra.mxu0 0
    %105 = vmatpush.bf16.msra.mxu0 0
    %106 = vmatpush.bf16.msra.mxu0 0
    %107 = vmatpush.bf16.msra.mxu0 %v97
    %108 = vmatpush.bf16.msra.mxu0 %v83
    %109 = vmatpush.bf16.msra.mxu0 %v81
    %110 = vmatmul.bf16.gmra.mxu0 %v93
    %v111 = vpop.f32.mrf.mxu0
    %v112 = vadd.f32 %v64, %v111
    %v113 = vpop.f32.mrf.mxu0
    %114 = vdwg.mxu0
    %115 = vmatpush.bf16.msra.mxu0 0
    %116 = vmatpush.bf16.msra.mxu0 0
    %117 = vmatpush.bf16.msra.mxu0 0
    %118 = vmatpush.bf16.msra.mxu0 0
    %119 = vmatpush.bf16.msra.mxu0 0
    %120 = vmatpush.bf16.msra.mxu0 %v100
    %121 = vmatpush.bf16.msra.mxu0 %v84
    %122 = vmatpush.bf16.msra.mxu0 %v82
    %123 = vmatmul.bf16.gmra.mxu0 %v93
    %v124 = vpop.f32.mrf.mxu0
    %v125 = vadd.f32 %v65, %v124
    %v126 = vpop.f32.mrf.mxu0
    %127 = vdwg.mxu0
    %v128 = vld [vmem:[%s0] sm:$0xff]
    %130 = vset.pattern.permute.xlu0 0
    %131 = vperm.xlu0 %130, %v128
    %v132 = vpop.permute.xlu0 %131
    %v134 = vperm.slane %v56, 0
    %v135 = vmul.f32 %v132, %v134
    %v136 = vadd.f32 %v112, %v135
    %v137 = vxor.u32 %v136, 2147483648
    %v138 = vmul.f32 %v137, 1.442695
    %v139 = vpow.pop %v138
    %v140 = vadd.f32 %v139, 1.0
    %v141 = vrcp.pop %v140
    %v142 = vmul.f32 %v140, %v141
    %v143 = vsub.f32 1.0, %v142
    %v144 = vmul.f32 %v141, %v143
    %v145 = vadd.f32 %v141, %v144
    %vm146 = vweird.f32 %v140
    %vm147 = vweird.f32 %v141
    %vm148 = vmor %vm146, %vm147
    %v149 = vsel %vm148, %v141, %v145
    %v150 = vand.u32 2147483647, %v140
    %vm151 = vcmp.eq.f32.partialorder %v150, 8.507059e+37
    %v152 = vand.u32 %v140, 2147483648
    %v153 = vor.u32 1.1754944e-38, %v152
    %v154 = vsel %vm151, %v153, %v149
    %v155 = vmul.f32 1.0, %v154
    %v156 = vtanh.pop %v136
    %158 = vrot.lane.b32.xlu0 %v55, 108
    %v159 = vpop.permute.xlu0 %158
    %v161 = vmul.f32 %v155, %v159
    %163 = vrot.lane.b32.xlu0 %v156, 68
    %v164 = vpop.permute.xlu0 %163
    %v166 = vmul.f32 %v155, %v164
    %168 = vrot.lane.b32.xlu0 %v166, 20
    %v169 = vpop.permute.xlu0 %168
    %v171 = vadd.f32 %v161, %v169
    %v172 = vtanh.pop %v171
    %174 = vrot.lane.b32.xlu0 %v172, 20
    %v175 = vpop.permute.xlu0 %174
    %v177 = vmul.f32 %v155, %v175
    %v178 = vpack.c.bf16 %v177, %v177
    %v179 = vld [vmem:[#allocation4] sm:$0xf]
    %v180 = vld [vmem:[#allocation4 + $0x4] sm:$0xf]
    %v181 = vld [vmem:[#allocation4 + $0x8] sm:$0x3]
    %183 = vrot.lane.b32.xlu0 %v178, 88
    %v184 = vpop.permute.xlu0 %183
    %v188 = vunpack.c.l.b16 %v179
    %v189 = vunpack.c.l.b16 %v180
    %v190 = vunpack.c.l.b16 %v181
    %v191 = vpack.c.b16 %v189, %v188
    %v192 = vpack.c.b16 %v190, %v190
    %vm194 = vcmask 162816
    %v196 = vsel %vm194, %v184, 0
    %vm198 = vcmask 1041408
    %v200 = vsel %vm198, %v192, 0
    %202 = vmatpush.bf16.msra.mxu0 0
    %203 = vmatpush.bf16.msra.mxu0 0
    %204 = vmatpush.bf16.msra.mxu0 0
    %205 = vmatpush.bf16.msra.mxu0 0
    %206 = vmatpush.bf16.msra.mxu0 0
    %207 = vmatpush.bf16.msra.mxu0 0
    %208 = vmatpush.bf16.msra.mxu0 %v200
    %209 = vmatpush.bf16.msra.mxu0 %v191
    %210 = vmatmul.bf16.gmra.mxu0 %v196
    %v211 = vpop.f32.mrf.mxu0
    %v212 = vadd.f32 0.0, %v211
    %v213 = vpop.f32.mrf.mxu0
    %214 = vdwg.mxu0
    %216 = vrot.lane.b32.xlu0 %v212, 80
    %v217 = vpop.permute.xlu0 %216
    %v219 = vadd.f32 %v112, %v217
    %v220 = vadd.f32 %v125, %v217
    %v221 = vxor.u32 %v219, 2147483648
    %v222 = vxor.u32 %v220, 2147483648
    %v223 = vmul.f32 %v221, 1.442695
    %v224 = vpow.pop %v223
    %v225 = vmul.f32 %v222, 1.442695
    %v226 = vpow.pop %v225
    %v227 = vadd.f32 %v224, 1.0
    %v228 = vadd.f32 %v226, 1.0
    %v229 = vrcp.pop %v227
    %v230 = vmul.f32 %v227, %v229
    %v231 = vsub.f32 1.0, %v230
    %v232 = vmul.f32 %v229, %v231
    %v233 = vadd.f32 %v229, %v232
    %vm234 = vweird.f32 %v227
    %vm235 = vweird.f32 %v229
    %vm236 = vmor %vm234, %vm235
    %v237 = vsel %vm236, %v229, %v233
    %v238 = vand.u32 2147483647, %v227
    %vm239 = vcmp.eq.f32.partialorder %v238, 8.507059e+37
    %v240 = vand.u32 %v227, 2147483648
    %v241 = vor.u32 1.1754944e-38, %v240
    %v242 = vsel %vm239, %v241, %v237
    %v243 = vmul.f32 1.0, %v242
    %v244 = vrcp.pop %v228
    %v245 = vmul.f32 %v228, %v244
    %v246 = vsub.f32 1.0, %v245
    %v247 = vmul.f32 %v244, %v246
    %v248 = vadd.f32 %v244, %v247
    %vm249 = vweird.f32 %v228
    %vm250 = vweird.f32 %v244
    %vm251 = vmor %vm249, %vm250
    %v252 = vsel %vm251, %v244, %v248
    %v253 = vand.u32 2147483647, %v228
    %vm254 = vcmp.eq.f32.partialorder %v253, 8.507059e+37
    %v255 = vand.u32 %v228, 2147483648
    %v256 = vor.u32 1.1754944e-38, %v255
    %v257 = vsel %vm254, %v256, %v252
    %v258 = vmul.f32 1.0, %v257
    %v259 = vtanh.pop %v220
    %260 = vrot.lane.b32.xlu0 %v55, 40
    %v261 = vpop.permute.xlu0 %260
    %v263 = vmul.f32 %v243, %v261
    %265 = vrot.lane.b32.xlu0 %v259, 68
    %v266 = vpop.permute.xlu0 %265
    %v268 = vmul.f32 %v243, %v266
    %270 = vrot.lane.b32.xlu0 %v268, 20
    %v271 = vpop.permute.xlu0 %270
    %v273 = vadd.f32 %v263, %v271
    %v274 = vtanh.pop %v273
    %276 = vrot.lane.b32.xlu0 %v274, 20
    %v277 = vpop.permute.xlu0 %276
    %v279 = vmul.f32 %v243, %v277
    %v280 = vmul.f32 %v258, %v277
    %v281 = vperm.slane %v56, 3
    %283 = vrot.lane.b32.xlu0 %v281, 120
    %v284 = vpop.permute.xlu0 %283
    %v286 = vmul.f32 %v279, %v284
    %v287 = vmul.f32 %v280, %v284
    %290 = vrot.lane.b32.xlu0 %v286, 8
    %v291 = vpop.permute.xlu0 %290
    %292 = vrot.lane.b32.xlu0 %v287, 8
    %v293 = vpop.permute.xlu0 %292
    %vm294 = vcmask 64512
    %v295 = vsel %vm294, %v291, %v293
    %v297 = vsel %vm194, %v295, 0.0
    %298 = vadd.xlane.f32.xlu0 %v297
    %v299 = vpop.xlane.xlu0 %298
    %v300 = vadd.f32 %v299, %v281
    %302 = vrot.lane.b32.xlu0 %v177, 88
    %v303 = vpop.permute.xlu0 %302
    %307 = vrot.lane.b32.xlu0 %v279, 28
    %v308 = vpop.permute.xlu0 %307
    %309 = vrot.lane.b32.xlu0 %v280, 28
    %v310 = vpop.permute.xlu0 %309
    %vm311 = vcmask 228352
    %v312 = vsel %vm311, %v308, %v310
    %315 = vrot.lane.b32.xlu0 %v171, 20
    %v316 = vpop.permute.xlu0 %315
    %319 = vrot.lane.b32.xlu0 %v273, 88
    %v320 = vpop.permute.xlu0 %319
    %v322 = vsel %vm194, %v303, %v312
    %v323 = vsel %vm91, %v322, %v316
    %vm324 = vcmask 490496
    %v325 = vsel %vm324, %v323, %v320
    %vm326 = vcmask 654336
    %327 = vst.msk [vmem:[%s5] sm:$0xff] %vm326, %v325
    %329 = vrot.lane.b32.xlu0 %v300, 108
    %v330 = vpop.permute.xlu0 %329
    %vm332 = vcmask 7168
    %333 = vst.msk [vmem:[%s6] sm:$0xff] %vm332, %v330
    // Predicated region
    $region30: #{optimizer_forward_packed.1} parent=1 // pred_check
      _
    $region31: #{optimizer_forward_packed.1} parent=1 // pred_check_branch
      %335 = sbr.rel (0) target = $region33
    $region32: #{optimizer_forward_packed.1} parent=1 // pred_region
      _
    $region33: #{optimizer_forward_packed.1} parent=1 // pred_fallthru
      _
    // Predicated region
    $region34: #{optimizer_forward_packed.1} parent=1 // pred_check
      _
    $region35: #{optimizer_forward_packed.1} parent=1 // pred_check_branch
      %337 = sbr.rel (0) target = $region37
    $region36: #{optimizer_forward_packed.1} parent=1 // pred_region
      _
    $region37: #{optimizer_forward_packed.1} parent=1 // pred_fallthru
      _
    // Predicated region
    $region38: #{optimizer_forward_packed.1} parent=1 // pred_check
      _
    $region39: #{optimizer_forward_packed.1} parent=1 // pred_check_branch
      %339 = sbr.rel (0) target = $region41
    $region40: #{optimizer_forward_packed.1} parent=1 // pred_region
      _
    $region41: #{optimizer_forward_packed.1} parent=1 // pred_fallthru
      _
    // Predicated region
    $region42: #{optimizer_forward_packed.1} parent=1 // pred_check
      _
    $region43: #{optimizer_forward_packed.1} parent=1 // pred_check_branch
      %341 = sbr.rel (0) target = $region45
    $region44: #{optimizer_forward_packed.1} parent=1 // pred_region
      _
    $region45: #{optimizer_forward_packed.1} parent=1 // pred_fallthru
      _
    %342 = vsyncpa [#allocation3], 1
    %343 = vsyncpa [#allocation5], 1

</llo_original>
